<compile_context>
chip_gen: v7x
topology: tpu7x:2x2x1
jax: 0.10.0
libtpu: 0.0.40
codegen_flags: <defaults>
</compile_context>

<pallas_src>
import jax
import jax.numpy as jnp
import numpy as np
from jax.experimental import pallas as pl
from jax.experimental.pallas import tpu as pltpu

# Standard JPEG Annex-K quantization tables (flat length-64 vectors).
LUMINANCE_QTABLE = [
    16, 11, 10, 16, 24, 40, 51, 61,
    12, 12, 14, 19, 26, 58, 60, 55,
    14, 13, 16, 24, 40, 57, 69, 56,
    14, 17, 22, 29, 51, 87, 80, 62,
    18, 22, 37, 56, 68, 109, 103, 77,
    24, 35, 55, 64, 81, 104, 113, 92,
    49, 64, 78, 87, 103, 121, 120, 101,
    72, 92, 95, 98, 112, 100, 103, 99,
]
CHROMINANCE_QTABLE = [
    17, 18, 24, 47, 99, 99, 99, 99,
    18, 21, 26, 66, 99, 99, 99, 99,
    24, 26, 56, 99, 99, 99, 99, 99,
    47, 66, 99, 99, 99, 99, 99, 99,
    99, 99, 99, 99, 99, 99, 99, 99,
    99, 99, 99, 99, 99, 99, 99, 99,
    99, 99, 99, 99, 99, 99, 99, 99,
    99, 99, 99, 99, 99, 99, 99, 99,
]

_NUM_ROWS = 128  # sublane-aligned LUT rows; rows 1..100 are the real qualities.


def _jpeg_quality_scaling(quality: int = 75) -> int:
    """Host-side reference of the quality -> scale_factor mapping (for tests)."""
    quality = max(1, min(100, quality))
    return 5000 // quality if quality < 50 else 200 - quality * 2


def _build_qtable_lut_kernel(qt_ref, out_ref):
    # qt_ref:  (1, 128) int32 VMEM  (luma in lanes 0..63, chroma in 64..127)
    # out_ref: (128, 128) f32 VMEM  (row r = scaled tables for quality clip(r, 1, 100))
    #
    # Per-row quality from a 2-D iota along the sublane axis, clamped to [1,100].
    q = jnp.clip(
        jax.lax.broadcasted_iota(jnp.int32, out_ref.shape, 0), 1, 100
    ).astype(jnp.float32)

    # JPEG scale factor.  floor(f32(5000/q)) == 5000 // q exactly: for q in
    # [1,100] the true quotient is either an exact integer (exactly
    # representable) or at least 1/q >= 0.01 away from the integer above,
    # far larger than half an f32 ulp at magnitude <= 5000 (~5e-4).
    sf = jnp.where(q < 50.0, jnp.floor(5000.0 / q), 200.0 - 2.0 * q)

    # Elementwise scale / floor / clamp on the VPU (16 vregs total).
    # qt <= 255 and sf <= 5000 => qt*sf + 50 <= 1,275,050 < 2^24, exact in f32;
    # the correctly-rounded /100.0 never crosses an integer boundary at these
    # magnitudes, so jnp.floor matches torch's integer floor-division exactly.
    # Do NOT replace /100.0 with *0.01 (0.01 is inexact and breaks the floor).
    qt = qt_ref[...].astype(jnp.float32)  # (1, 128), broadcast over rows
    scaled = jnp.floor((qt * sf + 50.0) / 100.0)
    out_ref[...] = jnp.clip(scaled, 1.0, 255.0)


def _build_qtable_lut(packed_qt: jax.Array) -> jax.Array:
    """packed_qt: (1, 128) int32 -> (128, 128) f32 quality lookup table."""
    return pl.pallas_call(
        _build_qtable_lut_kernel,
        out_shape=jax.ShapeDtypeStruct((_NUM_ROWS, 128), jnp.float32),
        in_specs=[pl.BlockSpec(memory_space=pltpu.MemorySpace.VMEM)],
        out_specs=pl.BlockSpec(memory_space=pltpu.MemorySpace.VMEM),
    )(packed_qt)


@jax.jit
def _lookup_packed(lut: jax.Array, quality) -> jax.Array:
    """Lane-dense (1, 128) scaled row for `quality` (no kernel launch)."""
    q = jnp.clip(jnp.asarray(quality, jnp.int32), 1, 100)
    return jax.lax.dynamic_slice(lut, (q, jnp.int32(0)), (1, 128))


@jax.jit
def _lookup_nchw(lut: jax.Array, quality):
    """Torch-matching (1, 64, 1, 1) luma/chroma float tables for `quality`."""
    row = _lookup_packed(lut, quality)  # fuses: one 512 B slice of the LUT
    luma = row[:, :64].reshape(1, 64, 1, 1)
    chroma = row[:, 64:].reshape(1, 64, 1, 1)
    return luma, chroma


class QTableScaler:
    """JAX/Pallas port of the PyTorch QTableScaler module.

    The quality -> scaled-qtable map is precomputed once at construction with a
    single Pallas kernel launch; __call__ is a jitted row lookup.
    """

    def __init__(self, luma_qtable=LUMINANCE_QTABLE, chroma_qtable=CHROMINANCE_QTABLE):
        luma = np.asarray(luma_qtable, dtype=np.int64).reshape(-1)
        chroma = np.asarray(chroma_qtable, dtype=np.int64).reshape(-1)
        if luma.size != 64 or chroma.size != 64:
            raise ValueError("qtables must have 64 entries each")
        if (luma.min() < 0 or luma.max() > 255 or chroma.min() < 0 or chroma.max() > 255):
            # TODO(synk): add an integer floor-division path for 16-bit qtables;
            # the exact-floor-via-f32 argument only holds for entries <= 255.
            raise ValueError("qtable entries must be in [0, 255]")

        # Buffers kept as (1, C, 1, 1) like the torch module (NCHW).
        self.luma_qtable = jnp.asarray(luma, dtype=jnp.int32).reshape(1, 64, 1, 1)
        self.chroma_qtable = jnp.asarray(chroma, dtype=jnp.int32).reshape(1, 64, 1, 1)

        # Lane-dense (1, 128) slab: luma in lanes 0..63, chroma in 64..127.
        packed = jnp.asarray(
            np.concatenate([luma, chroma]).reshape(1, 128), dtype=jnp.int32
        )
        # One Pallas launch, once, at init: builds the full (128, 128) f32 LUT.
        self._lut = _build_qtable_lut(packed)

    def __call__(self, quality):
        # `quality` may be a Python int or a traced/concrete int array; the cast
        # and clamp happen inside jit (no eager dispatch per call, no retrace
        # per quality value).
        return _lookup_nchw(self._lut, quality)

    def packed(self, quality):
        # Lane-dense (1, 128) row for downstream kernels that want one
        # unmasked vld instead of two lane-sparse (1, 64, 1, 1) buffers.
        return _lookup_packed(self._lut, quality)


def _reference(qtable_1d, quality):
    sf = _jpeg_quality_scaling(int(quality))
    q = np.asarray(qtable_1d, dtype=np.int64)
    scaled = (q * sf + 50) // 100
    return np.clip(scaled, 1, 255).astype(np.float32).reshape(1, -1, 1, 1)


if __name__ == "__main__":
    # Deterministic setup; the module has no random weights (its "parameters"
    # are the standard JPEG qtable buffers), so the key only picks an extra
    # random quality to test.
    key = jax.random.PRNGKey(0)
    q_rand = int(jax.random.randint(key, (), 1, 101))

    scaler = QTableScaler()
    jax.block_until_ready(scaler._lut)

    # Exhaustive check of the Pallas-built LUT against the integer reference.
    lut_np = np.asarray(scaler._lut)
    for quality in range(1, 101):
        ref_l = _reference(LUMINANCE_QTABLE, quality).reshape(64)
        ref_c = _reference(CHROMINANCE_QTABLE, quality).reshape(64)
        np.testing.assert_array_equal(lut_np[quality, :64], ref_l)
        np.testing.assert_array_equal(lut_np[quality, 64:], ref_c)

    # Forward-pass checks (including qualities that must clamp to [1, 100]).
    for quality in (42, 90, 1, 50, 100, 0, 150, q_rand):
        luma, chroma = scaler(quality)
        luma = jax.block_until_ready(luma)
        chroma = jax.block_until_ready(chroma)

        assert luma.shape == (1, 64, 1, 1) and luma.dtype == jnp.float32
        assert chroma.shape == (1, 64, 1, 1) and chroma.dtype == jnp.float32

        np.testing.assert_array_equal(np.asarray(luma), _reference(LUMINANCE_QTABLE, quality))
        np.testing.assert_array_equal(np.asarray(chroma), _reference(CHROMINANCE_QTABLE, quality))

        packed = jax.block_until_ready(scaler.packed(quality))
        np.testing.assert_array_equal(np.asarray(packed[0, :64]),
                                      _reference(LUMINANCE_QTABLE, quality).reshape(64))
        np.testing.assert_array_equal(np.asarray(packed[0, 64:]),
                                      _reference(CHROMINANCE_QTABLE, quality).reshape(64))

    print("KERNEL_OK")
</pallas_src>

<mosaic_0001>
module attributes {stable_mosaic.version = 11 : i64} {
  func.func @_build_qtable_lut_kernel(%arg0: memref<1x128xi32, #tpu.memory_space<vmem>>, %arg1: memref<128x128xf32, #tpu.memory_space<vmem>>) attributes {dimension_semantics = [], scalar_prefetch = 0 : i64, scratch_operands = 0 : i64, tpu.core_type = #tpu.core_type<tc>} {
    %0 = tpu.iota {dimensions = array<i32: 0>} : vector<128x128xi32>
    %c1_i32 = arith.constant 1 : i32
    %c100_i32 = arith.constant 100 : i32
    %1 = vector.broadcast %c1_i32 : i32 to vector<128x128xi32>
    %2 = arith.maxsi %1, %0 : vector<128x128xi32>
    %3 = vector.broadcast %c100_i32 : i32 to vector<128x128xi32>
    %4 = arith.minsi %3, %2 : vector<128x128xi32>
    %5 = arith.sitofp %4 : vector<128x128xi32> to vector<128x128xf32>
    %cst = arith.constant 5.000000e+01 : f32
    %6 = vector.broadcast %cst : f32 to vector<128x128xf32>
    %7 = arith.cmpf olt, %5, %6 : vector<128x128xf32>
    %cst_0 = arith.constant 5.000000e+03 : f32
    %8 = vector.broadcast %cst_0 : f32 to vector<128x128xf32>
    %9 = arith.divf %8, %5 : vector<128x128xf32>
    %10 = math.floor %9 : vector<128x128xf32>
    %cst_1 = arith.constant 2.000000e+00 : f32
    %11 = vector.broadcast %cst_1 : f32 to vector<128x128xf32>
    %12 = arith.mulf %11, %5 : vector<128x128xf32>
    %cst_2 = arith.constant 2.000000e+02 : f32
    %13 = vector.broadcast %cst_2 : f32 to vector<128x128xf32>
    %14 = arith.subf %13, %12 : vector<128x128xf32>
    %15 = arith.select %7, %10, %14 : vector<128x128xi1>, vector<128x128xf32>
    %c0 = arith.constant 0 : index
    %c0_3 = arith.constant 0 : index
    %16 = vector.load %arg0[%c0, %c0_3] : memref<1x128xi32, #tpu.memory_space<vmem>>, vector<1x128xi32>
    %17 = arith.sitofp %16 : vector<1x128xi32> to vector<1x128xf32>
    %18 = vector.broadcast %17 : vector<1x128xf32> to vector<128x128xf32>
    %19 = arith.mulf %18, %15 : vector<128x128xf32>
    %cst_4 = arith.constant 5.000000e+01 : f32
    %20 = vector.broadcast %cst_4 : f32 to vector<128x128xf32>
    %21 = arith.addf %19, %20 : vector<128x128xf32>
    %cst_5 = arith.constant 1.000000e+02 : f32
    %22 = vector.broadcast %cst_5 : f32 to vector<128x128xf32>
    %23 = arith.divf %21, %22 : vector<128x128xf32>
    %24 = math.floor %23 : vector<128x128xf32>
    %cst_6 = arith.constant 1.000000e+00 : f32
    %cst_7 = arith.constant 2.550000e+02 : f32
    %25 = vector.broadcast %cst_6 : f32 to vector<128x128xf32>
    %26 = arith.maximumf %25, %24 : vector<128x128xf32>
    %27 = vector.broadcast %cst_7 : f32 to vector<128x128xf32>
    %28 = arith.minimumf %27, %26 : vector<128x128xf32>
    %c0_8 = arith.constant 0 : index
    %c0_9 = arith.constant 0 : index
    %29 = vector.load %arg1[%c0_8, %c0_9] : memref<128x128xf32, #tpu.memory_space<vmem>>, vector<128x128xf32>
    tpu.vector_store %arg1[%c0_8, %c0_9], %28 {strides = array<i32>} : memref<128x128xf32, #tpu.memory_space<vmem>>, vector<128x128xf32>,
    return
  }
}

</mosaic_0001>

<llo_original>
// kernel: tpu_custom_call.1
$region0: #{tpu_custom_call.1}
  #allocation0 [shape = 'u32[]', space=smem, size = 0x4, offset = 0x4, fixed_abs, tag = 'smem constant byte address 0x4 - core index']
  #allocation1 [shape = 'u32[144,128]{1,0:T(1,128)}', space=vmem, size = 0x12000, scoped, tag = 'internal scratch']
  %s0 = inlined_call_operand.hbm [shape: s32[1,128], index: 0, kind: input, shape index: {}]
  %s1 = inlined_call_operand.hbm [shape: f32[128,128], index: 1, kind: output, shape index: {}]
  %s2 = sld [smem:[#allocation0]]
  $region18: #{tpu_custom_call.1} parent=0
    _
  %s4 = ssub.s32 1, %s2
  %s5 = scalar_select 0, %s4, %s2
  $region1: #{tpu_custom_call.1} parent=0
    #allocation2 [shape = 'u8[512]{0}', space=vmem, size = 0x400, scoped, tag = 'input window, operand 0, single buffered']
    #allocation3 [shape = 's32[1]{0}', space=sflag, size = 0x4, scoped, tag = 'scoped memory for tpu_custom_call.1']
    #allocation4 [shape = 's32[1]{0}', space=sflag, size = 0x4, scoped, tag = 'scoped memory for tpu_custom_call.1']
    #allocation5 [shape = 'u8[65536]{0}', space=vmem, size = 0x10000, scoped, tag = 'output window, operand 0, single buffered']
    %6 = vsyncpa [#allocation3], 0
    %7 = vsyncpa [#allocation4], 0
    // Predicated region
    $region2: #{tpu_custom_call.1} parent=1 // pred_check
      _
    $region3: #{tpu_custom_call.1} parent=1 // pred_check_branch
      %9 = sbr.rel (0) target = $region5
    $region4: #{tpu_custom_call.1} parent=1 // pred_region
      %s11 = ssub.s32 16, 16
      %12 = vsyncadd [#allocation3], %s11
      %s14 = sshll.u32 [#allocation2], 4
      %s15 = int_to_ptr.vmem [resolvable:$true] %s14
      %17 = dma.hbm_to_vmem [thread:$0]  %s0, 16, %s15, [#allocation3]
    $region5: #{tpu_custom_call.1} parent=1 // pred_fallthru
      _
    // Predicated region
    $region6: #{tpu_custom_call.1} parent=1 // pred_check
      _
    $region7: #{tpu_custom_call.1} parent=1 // pred_check_branch
      %19 = sbr.rel (0) target = $region9
    $region8: #{tpu_custom_call.1} parent=1 // pred_region
      %20 = dma.done [#allocation3], 16
    $region9: #{tpu_custom_call.1} parent=1 // pred_fallthru
      _
    %v21 = vlaneseq
    %v22 = vshrl.u32 %v21, 7
    %v23 = vadd.s32 %v22, 8
    %v24 = vadd.s32 %v22, 16
    %v25 = vadd.s32 %v22, 24
    %v26 = vadd.s32 %v22, 32
    %v27 = vadd.s32 %v22, 40
    %v28 = vadd.s32 %v22, 48
    %v29 = vadd.s32 %v22, 56
    %v30 = vadd.s32 %v22, 64
    %v31 = vadd.s32 %v22, 72
    %v32 = vadd.s32 %v22, 80
    %v33 = vadd.s32 %v22, 88
    %v34 = vadd.s32 %v22, 96
    %v35 = vadd.s32 %v22, 104
    %v36 = vadd.s32 %v22, 112
    %v37 = vadd.s32 %v22, 120
    %vm38 = vcmp.gt.s32.totalorder %v22, 1
    %v39 = vsel %vm38, %v22, 1
    %vm40 = vcmp.gt.s32.totalorder %v23, 1
    %v41 = vsel %vm40, %v23, 1
    %vm42 = vcmp.gt.s32.totalorder %v24, 1
    %v43 = vsel %vm42, %v24, 1
    %vm44 = vcmp.gt.s32.totalorder %v25, 1
    %v45 = vsel %vm44, %v25, 1
    %vm46 = vcmp.gt.s32.totalorder %v26, 1
    %v47 = vsel %vm46, %v26, 1
    %vm48 = vcmp.gt.s32.totalorder %v27, 1
    %v49 = vsel %vm48, %v27, 1
    %vm50 = vcmp.gt.s32.totalorder %v28, 1
    %v51 = vsel %vm50, %v28, 1
    %vm52 = vcmp.gt.s32.totalorder %v29, 1
    %v53 = vsel %vm52, %v29, 1
    %vm54 = vcmp.gt.s32.totalorder %v30, 1
    %v55 = vsel %vm54, %v30, 1
    %vm56 = vcmp.gt.s32.totalorder %v31, 1
    %v57 = vsel %vm56, %v31, 1
    %vm58 = vcmp.gt.s32.totalorder %v32, 1
    %v59 = vsel %vm58, %v32, 1
    %vm60 = vcmp.gt.s32.totalorder %v33, 1
    %v61 = vsel %vm60, %v33, 1
    %vm62 = vcmp.gt.s32.totalorder %v34, 1
    %v63 = vsel %vm62, %v34, 1
    %vm64 = vcmp.gt.s32.totalorder %v35, 1
    %v65 = vsel %vm64, %v35, 1
    %vm66 = vcmp.gt.s32.totalorder %v36, 1
    %v67 = vsel %vm66, %v36, 1
    %vm68 = vcmp.gt.s32.totalorder %v37, 1
    %v69 = vsel %vm68, %v37, 1
    %vm70 = vcmp.lt.s32.totalorder %v39, 100
    %v71 = vsel %vm70, %v39, 100
    %vm72 = vcmp.lt.s32.totalorder %v41, 100
    %v73 = vsel %vm72, %v41, 100
    %vm74 = vcmp.lt.s32.totalorder %v43, 100
    %v75 = vsel %vm74, %v43, 100
    %vm76 = vcmp.lt.s32.totalorder %v45, 100
    %v77 = vsel %vm76, %v45, 100
    %vm78 = vcmp.lt.s32.totalorder %v47, 100
    %v79 = vsel %vm78, %v47, 100
    %vm80 = vcmp.lt.s32.totalorder %v49, 100
    %v81 = vsel %vm80, %v49, 100
    %vm82 = vcmp.lt.s32.totalorder %v51, 100
    %v83 = vsel %vm82, %v51, 100
    %vm84 = vcmp.lt.s32.totalorder %v53, 100
    %v85 = vsel %vm84, %v53, 100
    %vm86 = vcmp.lt.s32.totalorder %v55, 100
    %v87 = vsel %vm86, %v55, 100
    %vm88 = vcmp.lt.s32.totalorder %v57, 100
    %v89 = vsel %vm88, %v57, 100
    %vm90 = vcmp.lt.s32.totalorder %v59, 100
    %v91 = vsel %vm90, %v59, 100
    %vm92 = vcmp.lt.s32.totalorder %v61, 100
    %v93 = vsel %vm92, %v61, 100
    %vm94 = vcmp.lt.s32.totalorder %v63, 100
    %v95 = vsel %vm94, %v63, 100
    %vm96 = vcmp.lt.s32.totalorder %v65, 100
    %v97 = vsel %vm96, %v65, 100
    %vm98 = vcmp.lt.s32.totalorder %v67, 100
    %v99 = vsel %vm98, %v67, 100
    %vm100 = vcmp.lt.s32.totalorder %v69, 100
    %v101 = vsel %vm100, %v69, 100
    %v102 = vcvt.s32.f32 %v71
    %v103 = vcvt.s32.f32 %v73
    %v104 = vcvt.s32.f32 %v75
    %v105 = vcvt.s32.f32 %v77
    %v106 = vcvt.s32.f32 %v79
    %v107 = vcvt.s32.f32 %v81
    %v108 = vcvt.s32.f32 %v83
    %v109 = vcvt.s32.f32 %v85
    %v110 = vcvt.s32.f32 %v87
    %v111 = vcvt.s32.f32 %v89
    %v112 = vcvt.s32.f32 %v91
    %v113 = vcvt.s32.f32 %v93
    %v114 = vcvt.s32.f32 %v95
    %v115 = vcvt.s32.f32 %v97
    %v116 = vcvt.s32.f32 %v99
    %v117 = vcvt.s32.f32 %v101
    %vm118 = vcmp.lt.f32.partialorder %v102, 50.0
    %vm119 = vcmp.lt.f32.partialorder %v103, 50.0
    %vm120 = vcmp.lt.f32.partialorder %v104, 50.0
    %vm121 = vcmp.lt.f32.partialorder %v105, 50.0
    %vm122 = vcmp.lt.f32.partialorder %v106, 50.0
    %vm123 = vcmp.lt.f32.partialorder %v107, 50.0
    %vm124 = vcmp.lt.f32.partialorder %v108, 50.0
    %vm125 = vcmp.lt.f32.partialorder %v109, 50.0
    %vm126 = vcmp.lt.f32.partialorder %v110, 50.0
    %vm127 = vcmp.lt.f32.partialorder %v111, 50.0
    %vm128 = vcmp.lt.f32.partialorder %v112, 50.0
    %vm129 = vcmp.lt.f32.partialorder %v113, 50.0
    %vm130 = vcmp.lt.f32.partialorder %v114, 50.0
    %vm131 = vcmp.lt.f32.partialorder %v115, 50.0
    %vm132 = vcmp.lt.f32.partialorder %v116, 50.0
    %vm133 = vcmp.lt.f32.partialorder %v117, 50.0
    %v134 = vrcp.pop %v102
    %v135 = vmul.f32 5000.0, %v134
    %v136 = vrcp.pop %v103
    %v137 = vmul.f32 5000.0, %v136
    %v138 = vrcp.pop %v104
    %v139 = vmul.f32 5000.0, %v138
    %v140 = vrcp.pop %v105
    %v141 = vmul.f32 5000.0, %v140
    %v142 = vrcp.pop %v106
    %v143 = vmul.f32 5000.0, %v142
    %v144 = vrcp.pop %v107
    %v145 = vmul.f32 5000.0, %v144
    %v146 = vrcp.pop %v108
    %v147 = vmul.f32 5000.0, %v146
    %v148 = vrcp.pop %v109
    %v149 = vmul.f32 5000.0, %v148
    %v150 = vrcp.pop %v110
    %v151 = vmul.f32 5000.0, %v150
    %v152 = vrcp.pop %v111
    %v153 = vmul.f32 5000.0, %v152
    %v154 = vrcp.pop %v112
    %v155 = vmul.f32 5000.0, %v154
    %v156 = vrcp.pop %v113
    %v157 = vmul.f32 5000.0, %v156
    %v158 = vrcp.pop %v114
    %v159 = vmul.f32 5000.0, %v158
    %v160 = vrcp.pop %v115
    %v161 = vmul.f32 5000.0, %v160
    %v162 = vrcp.pop %v116
    %v163 = vmul.f32 5000.0, %v162
    %v164 = vrcp.pop %v117
    %v165 = vmul.f32 5000.0, %v164
    %v166 = vfloor.f32 %v135
    %v167 = vfloor.f32 %v137
    %v168 = vfloor.f32 %v139
    %v169 = vfloor.f32 %v141
    %v170 = vfloor.f32 %v143
    %v171 = vfloor.f32 %v145
    %v172 = vfloor.f32 %v147
    %v173 = vfloor.f32 %v149
    %v174 = vfloor.f32 %v151
    %v175 = vfloor.f32 %v153
    %v176 = vfloor.f32 %v155
    %v177 = vfloor.f32 %v157
    %v178 = vfloor.f32 %v159
    %v179 = vfloor.f32 %v161
    %v180 = vfloor.f32 %v163
    %v181 = vfloor.f32 %v165
    %v182 = vmul.f32 %v102, 2.0
    %v183 = vmul.f32 %v103, 2.0
    %v184 = vmul.f32 %v104, 2.0
    %v185 = vmul.f32 %v105, 2.0
    %v186 = vmul.f32 %v106, 2.0
    %v187 = vmul.f32 %v107, 2.0
    %v188 = vmul.f32 %v108, 2.0
    %v189 = vmul.f32 %v109, 2.0
    %v190 = vmul.f32 %v110, 2.0
    %v191 = vmul.f32 %v111, 2.0
    %v192 = vmul.f32 %v112, 2.0
    %v193 = vmul.f32 %v113, 2.0
    %v194 = vmul.f32 %v114, 2.0
    %v195 = vmul.f32 %v115, 2.0
    %v196 = vmul.f32 %v116, 2.0
    %v197 = vmul.f32 %v117, 2.0
    %v198 = vsub.f32 200.0, %v182
    %v199 = vsub.f32 200.0, %v183
    %v200 = vsub.f32 200.0, %v184
    %v201 = vsub.f32 200.0, %v185
    %v202 = vsub.f32 200.0, %v186
    %v203 = vsub.f32 200.0, %v187
    %v204 = vsub.f32 200.0, %v188
    %v205 = vsub.f32 200.0, %v189
    %v206 = vsub.f32 200.0, %v190
    %v207 = vsub.f32 200.0, %v191
    %v208 = vsub.f32 200.0, %v192
    %v209 = vsub.f32 200.0, %v193
    %v210 = vsub.f32 200.0, %v194
    %v211 = vsub.f32 200.0, %v195
    %v212 = vsub.f32 200.0, %v196
    %v213 = vsub.f32 200.0, %v197
    %v214 = vsel %vm118, %v166, %v198
    %v215 = vsel %vm119, %v167, %v199
    %v216 = vsel %vm120, %v168, %v200
    %v217 = vsel %vm121, %v169, %v201
    %v218 = vsel %vm122, %v170, %v202
    %v219 = vsel %vm123, %v171, %v203
    %v220 = vsel %vm124, %v172, %v204
    %v221 = vsel %vm125, %v173, %v205
    %v222 = vsel %vm126, %v174, %v206
    %v223 = vsel %vm127, %v175, %v207
    %v224 = vsel %vm128, %v176, %v208
    %v225 = vsel %vm129, %v177, %v209
    %v226 = vsel %vm130, %v178, %v210
    %v227 = vsel %vm131, %v179, %v211
    %v228 = vsel %vm132, %v180, %v212
    %v229 = vsel %vm133, %v181, %v213
    %v230 = vld [vmem:[#allocation2] sm:$0x1]
    %v231 = vcvt.s32.f32 %v230
    %v233 = vlaneseq
    %v234 = vshrl.u32 %v233, 7
    %v235 = vsub.s32 0, %v234
    %v236 = vrot.slane %v231, %v235
    %v238 = vmul.f32 %v236, %v214
    %v239 = vmul.f32 %v236, %v215
    %v240 = vmul.f32 %v236, %v216
    %v241 = vmul.f32 %v236, %v217
    %v242 = vmul.f32 %v236, %v218
    %v243 = vmul.f32 %v236, %v219
    %v244 = vmul.f32 %v236, %v220
    %v245 = vmul.f32 %v236, %v221
    %v246 = vmul.f32 %v236, %v222
    %v247 = vmul.f32 %v236, %v223
    %v248 = vmul.f32 %v236, %v224
    %v249 = vmul.f32 %v236, %v225
    %v250 = vmul.f32 %v236, %v226
    %v251 = vmul.f32 %v236, %v227
    %v252 = vmul.f32 %v236, %v228
    %v253 = vmul.f32 %v236, %v229
    %v254 = vadd.f32 %v238, 50.0
    %v255 = vadd.f32 %v239, 50.0
    %v256 = vadd.f32 %v240, 50.0
    %v257 = vadd.f32 %v241, 50.0
    %v258 = vadd.f32 %v242, 50.0
    %v259 = vadd.f32 %v243, 50.0
    %v260 = vadd.f32 %v244, 50.0
    %v261 = vadd.f32 %v245, 50.0
    %v262 = vadd.f32 %v246, 50.0
    %v263 = vadd.f32 %v247, 50.0
    %v264 = vadd.f32 %v248, 50.0
    %v265 = vadd.f32 %v249, 50.0
    %v266 = vadd.f32 %v250, 50.0
    %v267 = vadd.f32 %v251, 50.0
    %v268 = vadd.f32 %v252, 50.0
    %v269 = vadd.f32 %v253, 50.0
    %v270 = vrcp.pop 100.0
    %v271 = vmul.f32 %v254, %v270
    %v272 = vmul.f32 %v255, %v270
    %v273 = vmul.f32 %v256, %v270
    %v274 = vmul.f32 %v257, %v270
    %v275 = vmul.f32 %v258, %v270
    %v276 = vmul.f32 %v259, %v270
    %v277 = vmul.f32 %v260, %v270
    %v278 = vmul.f32 %v261, %v270
    %v279 = vmul.f32 %v262, %v270
    %v280 = vmul.f32 %v263, %v270
    %v281 = vmul.f32 %v264, %v270
    %v282 = vmul.f32 %v265, %v270
    %v283 = vmul.f32 %v266, %v270
    %v284 = vmul.f32 %v267, %v270
    %v285 = vmul.f32 %v268, %v270
    %v286 = vmul.f32 %v269, %v270
    %v287 = vfloor.f32 %v271
    %v288 = vfloor.f32 %v272
    %v289 = vfloor.f32 %v273
    %v290 = vfloor.f32 %v274
    %v291 = vfloor.f32 %v275
    %v292 = vfloor.f32 %v276
    %v293 = vfloor.f32 %v277
    %v294 = vfloor.f32 %v278
    %v295 = vfloor.f32 %v279
    %v296 = vfloor.f32 %v280
    %v297 = vfloor.f32 %v281
    %v298 = vfloor.f32 %v282
    %v299 = vfloor.f32 %v283
    %v300 = vfloor.f32 %v284
    %v301 = vfloor.f32 %v285
    %v302 = vfloor.f32 %v286
    %v303 = vmax.f32 %v287, 1.0
    %v304 = vmax.f32 %v288, 1.0
    %v305 = vmax.f32 %v289, 1.0
    %v306 = vmax.f32 %v290, 1.0
    %v307 = vmax.f32 %v291, 1.0
    %v308 = vmax.f32 %v292, 1.0
    %v309 = vmax.f32 %v293, 1.0
    %v310 = vmax.f32 %v294, 1.0
    %v311 = vmax.f32 %v295, 1.0
    %v312 = vmax.f32 %v296, 1.0
    %v313 = vmax.f32 %v297, 1.0
    %v314 = vmax.f32 %v298, 1.0
    %v315 = vmax.f32 %v299, 1.0
    %v316 = vmax.f32 %v300, 1.0
    %v317 = vmax.f32 %v301, 1.0
    %v318 = vmax.f32 %v302, 1.0
    %v319 = vmin.f32 %v303, 255.0
    %v320 = vmin.f32 %v304, 255.0
    %v321 = vmin.f32 %v305, 255.0
    %v322 = vmin.f32 %v306, 255.0
    %v323 = vmin.f32 %v307, 255.0
    %v324 = vmin.f32 %v308, 255.0
    %v325 = vmin.f32 %v309, 255.0
    %v326 = vmin.f32 %v310, 255.0
    %v327 = vmin.f32 %v311, 255.0
    %v328 = vmin.f32 %v312, 255.0
    %v329 = vmin.f32 %v313, 255.0
    %v330 = vmin.f32 %v314, 255.0
    %v331 = vmin.f32 %v315, 255.0
    %v332 = vmin.f32 %v316, 255.0
    %v333 = vmin.f32 %v317, 255.0
    %v334 = vmin.f32 %v318, 255.0
    %335 = vst [vmem:[#allocation5] sm:$0xff] %v319
    %336 = vst [vmem:[#allocation5 + $0x8] sm:$0xff] %v320
    %337 = vst [vmem:[#allocation5 + $0x10] sm:$0xff] %v321
    %338 = vst [vmem:[#allocation5 + $0x18] sm:$0xff] %v322
    %339 = vst [vmem:[#allocation5 + $0x20] sm:$0xff] %v323
    %340 = vst [vmem:[#allocation5 + $0x28] sm:$0xff] %v324
    %341 = vst [vmem:[#allocation5 + $0x30] sm:$0xff] %v325
    %342 = vst [vmem:[#allocation5 + $0x38] sm:$0xff] %v326
    %343 = vst [vmem:[#allocation5 + $0x40] sm:$0xff] %v327
    %344 = vst [vmem:[#allocation5 + $0x48] sm:$0xff] %v328
    %345 = vst [vmem:[#allocation5 + $0x50] sm:$0xff] %v329
    %346 = vst [vmem:[#allocation5 + $0x58] sm:$0xff] %v330
    %347 = vst [vmem:[#allocation5 + $0x60] sm:$0xff] %v331
    %348 = vst [vmem:[#allocation5 + $0x68] sm:$0xff] %v332
    %349 = vst [vmem:[#allocation5 + $0x70] sm:$0xff] %v333
    %350 = vst [vmem:[#allocation5 + $0x78] sm:$0xff] %v334
    // Predicated region
    $region10: #{tpu_custom_call.1} parent=1 // pred_check
      _
    $region11: #{tpu_custom_call.1} parent=1 // pred_check_branch
      %352 = sbr.rel (0) target = $region13
    $region12: #{tpu_custom_call.1} parent=1 // pred_region
      %s354 = ssub.s32 2048, 2048
      %355 = vsyncadd [#allocation4], %s354
      %s356 = sshll.u32 [#allocation5], 4
      %s357 = int_to_ptr.vmem [resolvable:$true] %s356
      %362 = dma.vmem_to_hbm [thread:$0]  %s357, 2048, %s1, [#allocation4], 128, 128, 8
    $region13: #{tpu_custom_call.1} parent=1 // pred_fallthru
      _
    // Predicated region
    $region14: #{tpu_custom_call.1} parent=1 // pred_check
      _
    $region15: #{tpu_custom_call.1} parent=1 // pred_check_branch
      %364 = sbr.rel (0) target = $region17
    $region16: #{tpu_custom_call.1} parent=1 // pred_region
      %365 = dma.done [#allocation4], 2048
    $region17: #{tpu_custom_call.1} parent=1 // pred_fallthru
      _
    %366 = vsyncpa [#allocation3], 1
    %367 = vsyncpa [#allocation4], 1

</llo_original>
